<compile_context>
chip_gen: v7x
topology: tpu7x:2x2x1
jax: 0.10.0
libtpu: 0.0.40
codegen_flags: <defaults>
</compile_context>

<pallas_src>
import math

import jax
import jax.numpy as jnp
from jax.experimental import pallas as pl
from jax.experimental.pallas import tpu as pltpu


def _power_relu_kernel(x_ref, o_ref, *, power):
    x = x_ref[...].astype(jnp.float32)          # compute in f32 (VPU-friendly)
    y = jnp.maximum(x, 0.0)                     # relu
    if isinstance(power, int) and power >= 1:
        acc = y
        for _ in range(power - 1):              # power=3 -> y*y*y, pure VPU
            acc = acc * y
    else:
        acc = y ** power
    o_ref[...] = acc.astype(o_ref.dtype)


_LANE = 128                      # vreg lane width
_SUBLANE = 8                     # vreg sublane count (f32)
_MAX_TILE_COLS = 2048            # lane-dense tile width cap (multiple of 128)
_TARGET_TILE_ELEMS = 1 << 20     # ~4 MiB of f32 per tile


def _lane_dense_2d_shape(shape):
    """Choose a (rows, cols) view of the flattened array keeping the lane
    (last) dimension as wide as possible -- without any HBM padding."""
    total = math.prod(shape) if shape else 1
    if total % _LANE == 0:
        cols = _LANE
        while cols * 2 <= _MAX_TILE_COLS and total % (cols * 2) == 0:
            cols *= 2
    else:
        cols = shape[-1] if len(shape) >= 1 else 1
        cols = max(cols, 1)
    return total // cols, cols


def power_relu(x: jax.Array, power: int = 3, *,
               max_tile_cols: int = _MAX_TILE_COLS,
               target_tile_elems: int = _TARGET_TILE_ELEMS) -> jax.Array:
    """Elementwise relu(x)**power for any-rank input (matches PyTorch module)."""
    orig_shape = x.shape
    orig_dtype = x.dtype
    total = math.prod(orig_shape) if orig_shape else 1
    if total == 0:
        return x

    rows, cols = _lane_dense_2d_shape(orig_shape)
    x2 = x.reshape(rows, cols)                  # contiguous reshape: no copy

    # --- Tile selection (legal: each of last two block dims is either a
    # multiple of (8, 128) or equal to the full array extent). ---
    if cols <= max_tile_cols:
        tile_cols = cols                        # full extent -> always legal
    else:
        tile_cols = max_tile_cols               # multiple of 128

    tile_rows = max(_SUBLANE, target_tile_elems // tile_cols)
    if tile_rows >= rows:
        tile_rows = rows                        # full extent -> always legal
    else:
        tile_rows = max(_SUBLANE, (tile_rows // _SUBLANE) * _SUBLANE)

    grid = (pl.cdiv(rows, tile_rows), pl.cdiv(cols, tile_cols))

    out2 = pl.pallas_call(
        lambda x_ref, o_ref: _power_relu_kernel(x_ref, o_ref, power=power),
        out_shape=jax.ShapeDtypeStruct((rows, cols), orig_dtype),
        grid=grid,
        in_specs=[pl.BlockSpec((tile_rows, tile_cols), lambda i, j: (i, j))],
        out_specs=pl.BlockSpec((tile_rows, tile_cols), lambda i, j: (i, j)),
        compiler_params=pltpu.CompilerParams(
            dimension_semantics=("parallel", "parallel"),
            vmem_limit_bytes=32 << 20),
    )(x2)

    return out2.reshape(orig_shape)


def power_relu_ref(x, power=3):
    return jnp.maximum(x, 0.0) ** power


if __name__ == "__main__":
    key = jax.random.PRNGKey(0)

    # Small NCHW input consistent with "size (N, *) tensor".
    x = jax.random.normal(key, (2, 4, 16, 16), dtype=jnp.float32)
    y = jax.block_until_ready(power_relu(x, power=3))
    assert y.shape == x.shape and y.dtype == x.dtype
    assert jnp.allclose(y, power_relu_ref(x, power=3), atol=1e-6, rtol=1e-6)

    # Narrow-lane shape (total not a multiple of 128): no HBM padding needed.
    x2 = jax.random.normal(jax.random.PRNGKey(1), (3, 5, 20), dtype=jnp.float32)
    y2 = jax.block_until_ready(power_relu(x2, power=3))
    assert jnp.allclose(y2, power_relu_ref(x2, power=3), atol=1e-6, rtol=1e-6)

    # Force multi-block grids with partial edge blocks (rows and lanes) by
    # shrinking the tile targets -- verifies the no-padding edge handling.
    x3 = jax.random.normal(jax.random.PRNGKey(2), (44, 1000), dtype=jnp.float32)
    y3 = jax.block_until_ready(power_relu(x3, power=3, target_tile_elems=8192))
    assert jnp.allclose(y3, power_relu_ref(x3, power=3), atol=1e-6, rtol=1e-6)

    x4 = jax.random.normal(jax.random.PRNGKey(3), (8, 3000), dtype=jnp.float32)
    y4 = jax.block_until_ready(power_relu(x4, power=3, target_tile_elems=8192))
    assert jnp.allclose(y4, power_relu_ref(x4, power=3), atol=1e-6, rtol=1e-6)

    # bf16 path: kernel computes in f32 internally, stores bf16.
    xb = jax.random.normal(jax.random.PRNGKey(4), (2, 4, 16, 16), dtype=jnp.bfloat16)
    yb = jax.block_until_ready(power_relu(xb, power=3))
    assert yb.dtype == jnp.bfloat16
    assert jnp.allclose(yb.astype(jnp.float32),
                        power_relu_ref(xb.astype(jnp.float32), power=3),
                        atol=2e-2, rtol=2e-2)

    print("KERNEL_OK")
</pallas_src>

<mosaic_0001>
module attributes {stable_mosaic.version = 11 : i64} {
  func.func @_lambda_(%arg0: i32, %arg1: i32, %arg2: memref<1x2048xf32, #tpu.memory_space<vmem>>, %arg3: memref<1x2048xf32, #tpu.memory_space<vmem>>) attributes {dimension_semantics = [#tpu.dimension_semantics<parallel>, #tpu.dimension_semantics<parallel>], iteration_bounds = array<i64: 1, 1>, scalar_prefetch = 0 : i64, scratch_operands = 0 : i64, tpu.core_type = #tpu.core_type<tc>, window_params = [{transform_indices = @transform_0, window_bounds = array<i64: 1, 2048>}, {transform_indices = @transform_1, window_bounds = array<i64: 1, 2048>}]} {
    %c0 = arith.constant 0 : index
    %c0_0 = arith.constant 0 : index
    %0 = vector.load %arg2[%c0, %c0_0] : memref<1x2048xf32, #tpu.memory_space<vmem>>, vector<1x2048xf32>
    %cst = arith.constant 0.000000e+00 : f32
    %1 = vector.broadcast %cst : f32 to vector<1x2048xf32>
    %2 = arith.maximumf %0, %1 : vector<1x2048xf32>
    %3 = arith.mulf %2, %2 : vector<1x2048xf32>
    %4 = arith.mulf %3, %2 : vector<1x2048xf32>
    %c0_1 = arith.constant 0 : index
    %c0_2 = arith.constant 0 : index
    %5 = vector.load %arg3[%c0_1, %c0_2] : memref<1x2048xf32, #tpu.memory_space<vmem>>, vector<1x2048xf32>
    tpu.vector_store %arg3[%c0_1, %c0_2], %4 {strides = array<i32>} : memref<1x2048xf32, #tpu.memory_space<vmem>>, vector<1x2048xf32>,
    return
  }
  func.func @transform_0(%arg0: i32, %arg1: i32) -> (i32, i32) {
    %c0_i32 = arith.constant 0 : i32
    return %arg0, %arg1 : i32, i32
  }
  func.func @transform_1(%arg0: i32, %arg1: i32) -> (i32, i32) {
    %c0_i32 = arith.constant 0 : i32
    return %arg0, %arg1 : i32, i32
  }
}

</mosaic_0001>

<llo_original>
// kernel: tpu_custom_call.1
$region0: #{tpu_custom_call.1}
  #allocation0 [shape = 'u32[]', space=smem, size = 0x4, offset = 0x4, fixed_abs, tag = 'smem constant byte address 0x4 - core index']
  #allocation1 [shape = 'u32[144,128]{1,0:T(1,128)}', space=vmem, size = 0x12000, scoped, tag = 'internal scratch']
  %s0 = inlined_call_operand.hbm [shape: f32[1,2048], index: 0, kind: input, shape index: {}]
  %s1 = inlined_call_operand.hbm [shape: f32[1,2048], index: 1, kind: output, shape index: {}]
  %s2 = sld [smem:[#allocation0]]
  $region18: #{tpu_custom_call.1} parent=0
    _
  %s4 = ssub.s32 1, %s2
  %s5 = scalar_select 0, %s4, %s2
  $region1: #{tpu_custom_call.1} parent=0
    #allocation2 [shape = 'u8[8192]{0}', space=vmem, size = 0x2000, scoped, tag = 'input window, operand 0, single buffered']
    #allocation3 [shape = 's32[1]{0}', space=sflag, size = 0x4, scoped, tag = 'scoped memory for tpu_custom_call.1']
    #allocation4 [shape = 's32[1]{0}', space=sflag, size = 0x4, scoped, tag = 'scoped memory for tpu_custom_call.1']
    #allocation5 [shape = 'u8[8192]{0}', space=vmem, size = 0x2000, scoped, tag = 'output window, operand 0, single buffered']
    %6 = vsyncpa [#allocation3], 0
    %7 = vsyncpa [#allocation4], 0
    // Predicated region
    $region2: #{tpu_custom_call.1} parent=1 // pred_check
      _
    $region3: #{tpu_custom_call.1} parent=1 // pred_check_branch
      %9 = sbr.rel (0) target = $region5
    $region4: #{tpu_custom_call.1} parent=1 // pred_region
      %s11 = ssub.s32 256, 256
      %12 = vsyncadd [#allocation3], %s11
      %s14 = sshll.u32 [#allocation2], 4
      %s15 = int_to_ptr.vmem [resolvable:$true] %s14
      %17 = dma.hbm_to_vmem [thread:$0]  %s0, 256, %s15, [#allocation3]
    $region5: #{tpu_custom_call.1} parent=1 // pred_fallthru
      _
    // Predicated region
    $region6: #{tpu_custom_call.1} parent=1 // pred_check
      _
    $region7: #{tpu_custom_call.1} parent=1 // pred_check_branch
      %19 = sbr.rel (0) target = $region9
    $region8: #{tpu_custom_call.1} parent=1 // pred_region
      %20 = dma.done [#allocation3], 256
    $region9: #{tpu_custom_call.1} parent=1 // pred_fallthru
      _
    %v21 = vld [vmem:[#allocation2] sm:$0xff]
    %v22 = vld [vmem:[#allocation2 + $0x8] sm:$0xff]
    %v23 = vmax.f32 %v21, 0.0
    %v24 = vmax.f32 %v22, 0.0
    %v25 = vmul.f32 %v23, %v23
    %v26 = vmul.f32 %v24, %v24
    %v27 = vmul.f32 %v25, %v23
    %v28 = vmul.f32 %v26, %v24
    %29 = vst [vmem:[#allocation5] sm:$0xff] %v27
    %30 = vst [vmem:[#allocation5 + $0x8] sm:$0xff] %v28
    // Predicated region
    $region10: #{tpu_custom_call.1} parent=1 // pred_check
      _
    $region11: #{tpu_custom_call.1} parent=1 // pred_check_branch
      %32 = sbr.rel (0) target = $region13
    $region12: #{tpu_custom_call.1} parent=1 // pred_region
      %s34 = ssub.s32 256, 256
      %35 = vsyncadd [#allocation4], %s34
      %s37 = sshll.u32 [#allocation5], 4
      %s38 = int_to_ptr.vmem [resolvable:$true] %s37
      %40 = dma.vmem_to_hbm [thread:$0]  %s38, 256, %s1, [#allocation4]
    $region13: #{tpu_custom_call.1} parent=1 // pred_fallthru
      _
    // Predicated region
    $region14: #{tpu_custom_call.1} parent=1 // pred_check
      _
    $region15: #{tpu_custom_call.1} parent=1 // pred_check_branch
      %42 = sbr.rel (0) target = $region17
    $region16: #{tpu_custom_call.1} parent=1 // pred_region
      %43 = dma.done [#allocation4], 256
    $region17: #{tpu_custom_call.1} parent=1 // pred_fallthru
      _
    %44 = vsyncpa [#allocation3], 1
    %45 = vsyncpa [#allocation4], 1

</llo_original>
